<compile_context>
chip_gen: v6e
topology: v6e:2x2x1
jax: 0.10.0
libtpu: 0.0.40
codegen_flags: <defaults>
</compile_context>

<pallas_src>
import functools
import math

import jax
import jax.numpy as jnp
from jax.experimental import pallas as pl
from jax.experimental.pallas import tpu as pltpu

_NEG_BIG = -1e30  # finite "minus infinity" used for padded vocab columns (exp -> 0)


def _round_up(x, m):
    return (x + m - 1) // m * m


def _generator_kernel(x_ref, w_ref, b_ref, o_ref, m_ref, l_ref):
    # x_ref: (tm, D) bf16   w_ref: (D, tn) bf16   b_ref: (1, tn) f32
    # o_ref: (tm, tn)       m_ref / l_ref: (tm, 1) f32 running max / sum-exp
    phase = pl.program_id(1)   # 0: accumulate online log-sum-exp stats, 1: write log-probs
    j = pl.program_id(2)       # vocab tile index

    # bf16 x bf16 -> f32 on the MXU; bias add + all softmax math in f32.
    logits = jnp.dot(x_ref[...], w_ref[...], preferred_element_type=jnp.float32)
    logits = logits + b_ref[...]

    @pl.when(jnp.logical_and(phase == 0, j == 0))
    def _():
        m_ref[...] = jnp.full_like(m_ref, -jnp.inf)
        l_ref[...] = jnp.zeros_like(l_ref)

    @pl.when(phase == 0)
    def _():
        m_prev = m_ref[...]
        m_new = jnp.maximum(m_prev, jnp.max(logits, axis=-1, keepdims=True))
        alpha = jnp.exp(m_prev - m_new)
        l_ref[...] = alpha * l_ref[...] + jnp.sum(jnp.exp(logits - m_new),
                                                  axis=-1, keepdims=True)
        m_ref[...] = m_new
        # o_ref is intentionally NOT written in phase 0; the out index_map maps all
        # phase-0 steps to one block so no stale VMEM is ever DMA'd back to HBM.

    @pl.when(phase == 1)
    def _():
        o_ref[...] = (logits - m_ref[...] - jnp.log(l_ref[...])).astype(o_ref.dtype)


@functools.partial(jax.jit, static_argnames=("vocab", "tm", "tn"))
def _generator_forward_2d(x2d, w_bf, b2d, *, vocab, tm, tn):
    """x2d: (M, D) activations; w_bf: (D, Vp) bf16 (pre-padded); b2d: (1, Vp) f32."""
    M, D = x2d.shape
    Dw, Vp = w_bf.shape
    assert D == Dw and Vp % tn == 0

    # Row tile: multiple of 16 (bf16 packs 16 sublanes per vreg), clamped to M.
    tm = min(_round_up(tm, 16), _round_up(M, 16))
    Mp = _round_up(M, tm)

    x_bf = x2d.astype(jnp.bfloat16)
    if Mp != M:
        x_bf = jnp.pad(x_bf, ((0, Mp - M), (0, 0)))

    n_row = Mp // tm
    n_voc = Vp // tn
    out_dtype = x2d.dtype
    out_itemsize = jnp.dtype(out_dtype).itemsize

    cost = pl.CostEstimate(
        flops=2 * 2 * Mp * D * Vp,                       # matmul runs in both phases
        transcendentals=Mp * Vp + Mp,                    # exp in phase 0 + log epilogue
        bytes_accessed=(Mp * D * 2                        # x resident per row tile
                        + 2 * n_row * (Vp * D * 2 + Vp * 4)   # weight+bias, 2 passes/row tile
                        + Mp * Vp * out_itemsize),        # single output write
    )

    # VMEM budget: double-buffered x / w / bias / out, scratch, f32 logits temporary.
    vmem_est = (2 * tm * D * 2 + 2 * D * tn * 2 + 2 * tn * 4
                + 2 * tm * tn * out_itemsize + 2 * tm * 4 * 2 + tm * tn * 4)
    vmem_limit = int(min(max(2 * vmem_est, 32 << 20), 96 << 20))

    out = pl.pallas_call(
        _generator_kernel,
        out_shape=jax.ShapeDtypeStruct((Mp, Vp), out_dtype),
        grid_spec=pltpu.PrefetchScalarGridSpec(
            num_scalar_prefetch=0,
            grid=(n_row, 2, n_voc),
            in_specs=[
                pl.BlockSpec((tm, D), lambda i, p, j: (i, 0)),   # activations row tile
                pl.BlockSpec((D, tn), lambda i, p, j: (0, j)),   # weight vocab tile
                pl.BlockSpec((1, tn), lambda i, p, j: (0, j)),   # bias vocab tile
            ],
            # phase 0 -> block (i, 0) for every j (never written => no garbage writeback);
            # phase 1 -> block (i, j) written with the final log-probs.
            out_specs=pl.BlockSpec((tm, tn), lambda i, p, j: (i, j * p)),
            scratch_shapes=[
                pltpu.VMEM((tm, 1), jnp.float32),   # running max
                pltpu.VMEM((tm, 1), jnp.float32),   # running sum of exp
            ],
        ),
        compiler_params=pltpu.CompilerParams(
            dimension_semantics=("parallel", "arbitrary", "arbitrary"),
            vmem_limit_bytes=vmem_limit),
        cost_estimate=cost,
    )(x_bf, w_bf, b2d)

    if Mp != M or Vp != vocab:
        out = out[:M, :vocab]   # drop padded rows / vocab columns
    return out


class PallasGenerator:
    """Pallas equivalent of Generator(nn.Linear(d_model, vocab) -> LogSoftmax(-1)).

    Weight (nn.Linear layout, (vocab, d_model)) and bias are transposed, bf16-cast and
    vocab-padded once here, so the per-call forward only streams bf16 weights.
    """

    def __init__(self, weight, bias, *, tm=256, tn=1024):
        V, D = weight.shape
        tn = int(min(_round_up(tn, 128), _round_up(V, 128)))   # lane-dense vocab tile
        Vp = _round_up(V, tn)

        w_t = jnp.asarray(weight, jnp.float32).T               # (D, V)
        b = jnp.asarray(bias, jnp.float32)
        if Vp != V:
            # padded vocab columns get a huge negative bias so they contribute 0 to lse
            w_t = jnp.pad(w_t, ((0, 0), (0, Vp - V)))
            b = jnp.pad(b, ((0, Vp - V),), constant_values=_NEG_BIG)

        self.w_bf = w_t.astype(jnp.bfloat16)                   # (D, Vp) bf16, once
        self.b2d = b.reshape(1, Vp)                            # (1, Vp) f32, once
        self.vocab = int(V)
        self.tm = int(tm)
        self.tn = tn

    def __call__(self, state):
        *lead, D = state.shape
        M = math.prod(lead) if lead else 1
        out2d = _generator_forward_2d(state.reshape(M, D), self.w_bf, self.b2d,
                                      vocab=self.vocab, tm=self.tm, tn=self.tn)
        return out2d.reshape(*lead, self.vocab)


if __name__ == "__main__":
    key = jax.random.PRNGKey(0)
    k_x, k_w, k_b = jax.random.split(key, 3)

    B, S, D, V = 2, 8, 32, 128   # batch, seq, d_model, vocab

    state = jax.random.normal(k_x, (B, S, D), dtype=jnp.float32)
    # deterministic synthetic nn.Linear(D, V) params in PyTorch layout: weight (V, D)
    bound = 1.0 / math.sqrt(D)
    weight = jax.random.uniform(k_w, (V, D), minval=-bound, maxval=bound,
                                dtype=jnp.float32)
    bias = jax.random.uniform(k_b, (V,), minval=-bound, maxval=bound,
                              dtype=jnp.float32)

    gen = PallasGenerator(weight, bias)          # one-time bf16 cast / padding
    out = jax.block_until_ready(gen(state))

    # reference with the same bf16 matmul precision (f32 accumulation / softmax)
    logits_bf = jnp.einsum("bsd,vd->bsv", state.astype(jnp.bfloat16),
                           weight.astype(jnp.bfloat16),
                           preferred_element_type=jnp.float32) + bias
    ref_bf = jax.nn.log_softmax(logits_bf, axis=-1)
    # full-f32 semantic reference (loose tolerance due to bf16 matmul inputs)
    ref_f32 = jax.nn.log_softmax(
        jnp.einsum("bsd,vd->bsv", state, weight) + bias, axis=-1)

    assert out.shape == (B, S, V)
    assert jnp.allclose(out, ref_bf, atol=1e-3, rtol=1e-3), "mismatch vs bf16 reference"
    assert jnp.allclose(out, ref_f32, atol=5e-2, rtol=5e-2), "mismatch vs f32 reference"

    print("KERNEL_OK")
</pallas_src>

<mosaic_0001>
module attributes {stable_mosaic.version = 11 : i64} {
  func.func @_generator_kernel(%arg0: i32, %arg1: i32, %arg2: i32, %arg3: memref<16x32xbf16, #tpu.memory_space<vmem>>, %arg4: memref<32x128xbf16, #tpu.memory_space<vmem>>, %arg5: memref<1x128xf32, #tpu.memory_space<vmem>>, %arg6: memref<16x128xf32, #tpu.memory_space<vmem>>, %arg7: memref<16x1xf32, #tpu.memory_space<vmem>>, %arg8: memref<16x1xf32, #tpu.memory_space<vmem>>) attributes {dimension_semantics = [#tpu.dimension_semantics<parallel>, #tpu.dimension_semantics<arbitrary>, #tpu.dimension_semantics<arbitrary>], iteration_bounds = array<i64: 1, 2, 1>, scalar_prefetch = 0 : i64, scratch_operands = 2 : i64, tpu.core_type = #tpu.core_type<tc>, window_params = [{transform_indices = @transform_0, window_bounds = array<i64: 16, 32>}, {transform_indices = @transform_1, window_bounds = array<i64: 32, 128>}, {transform_indices = @transform_2, window_bounds = array<i64: 1, 128>}, {transform_indices = @transform_3, window_bounds = array<i64: 16, 128>}]} {
    %c0 = arith.constant 0 : index
    %c0_0 = arith.constant 0 : index
    %0 = vector.load %arg3[%c0, %c0_0] : memref<16x32xbf16, #tpu.memory_space<vmem>>, vector<16x32xbf16>
    %c0_1 = arith.constant 0 : index
    %c0_2 = arith.constant 0 : index
    %1 = vector.load %arg4[%c0_1, %c0_2] : memref<32x128xbf16, #tpu.memory_space<vmem>>, vector<32x128xbf16>
    %cst = arith.constant dense<0.000000e+00> : vector<16x128xf32>
    %2 = tpu.matmul %0, %1, %cst {dimension_numbers = #tpu.dot_dimension_numbers<[1], [0], [0], [1], [0, 0, 1, 1], [], []>} : vector<16x32xbf16>, vector<32x128xbf16>, vector<16x128xf32> -> vector<16x128xf32>
    %c0_3 = arith.constant 0 : index
    %c0_4 = arith.constant 0 : index
    %3 = vector.load %arg5[%c0_3, %c0_4] : memref<1x128xf32, #tpu.memory_space<vmem>>, vector<1x128xf32>
    %4 = vector.broadcast %3 : vector<1x128xf32> to vector<16x128xf32>
    %5 = arith.addf %2, %4 : vector<16x128xf32>
    %c0_i32 = arith.constant 0 : i32
    %6 = arith.cmpi eq, %arg1, %c0_i32 : i32
    %c0_i32_5 = arith.constant 0 : i32
    %7 = arith.cmpi eq, %arg2, %c0_i32_5 : i32
    %8 = arith.andi %6, %7 : i1
    %9 = arith.extui %8 : i1 to i32
    %c0_i32_6 = arith.constant 0 : i32
    %10 = arith.cmpi ne, %9, %c0_i32_6 : i32
    scf.if %10 {
      %cst_10 = arith.constant 0xFF800000 : f32
      %17 = vector.broadcast %cst_10 : f32 to vector<16x1xf32>
      %c0_11 = arith.constant 0 : index
      %c0_12 = arith.constant 0 : index
      %18 = vector.load %arg7[%c0_11, %c0_12] : memref<16x1xf32, #tpu.memory_space<vmem>>, vector<16x1xf32>
      tpu.vector_store %arg7[%c0_11, %c0_12], %17 {strides = array<i32>} : memref<16x1xf32, #tpu.memory_space<vmem>>, vector<16x1xf32>,
      %cst_13 = arith.constant 0.000000e+00 : f32
      %19 = vector.broadcast %cst_13 : f32 to vector<16x1xf32>
      %c0_14 = arith.constant 0 : index
      %c0_15 = arith.constant 0 : index
      %20 = vector.load %arg8[%c0_14, %c0_15] : memref<16x1xf32, #tpu.memory_space<vmem>>, vector<16x1xf32>
      tpu.vector_store %arg8[%c0_14, %c0_15], %19 {strides = array<i32>} : memref<16x1xf32, #tpu.memory_space<vmem>>, vector<16x1xf32>,
    } else {
    }
    %c0_i32_7 = arith.constant 0 : i32
    %11 = arith.cmpi eq, %arg1, %c0_i32_7 : i32
    %12 = arith.extui %11 : i1 to i32
    %c0_i32_8 = arith.constant 0 : i32
    %13 = arith.cmpi ne, %12, %c0_i32_8 : i32
    scf.if %13 {
      %c0_10 = arith.constant 0 : index
      %c0_11 = arith.constant 0 : index
      %17 = vector.load %arg7[%c0_10, %c0_11] : memref<16x1xf32, #tpu.memory_space<vmem>>, vector<16x1xf32>
      %cst_12 = arith.constant dense<0xFF800000> : vector<16xf32>
      %18 = vector.multi_reduction <maximumf>, %5, %cst_12 [1] : vector<16x128xf32> to vector<16xf32>
      %19 = vector.shape_cast %18 : vector<16xf32> to vector<16x1xf32>
      %20 = arith.maximumf %17, %19 : vector<16x1xf32>
      %21 = arith.subf %17, %20 : vector<16x1xf32>
      %22 = math.exp %21 : vector<16x1xf32>
      %c0_13 = arith.constant 0 : index
      %c0_14 = arith.constant 0 : index
      %23 = vector.load %arg8[%c0_13, %c0_14] : memref<16x1xf32, #tpu.memory_space<vmem>>, vector<16x1xf32>
      %24 = arith.mulf %22, %23 : vector<16x1xf32>
      %25 = vector.broadcast %20 : vector<16x1xf32> to vector<16x128xf32>
      %26 = arith.subf %5, %25 : vector<16x128xf32>
      %27 = math.exp %26 : vector<16x128xf32>
      %cst_15 = arith.constant dense<0.000000e+00> : vector<16xf32>
      %28 = vector.multi_reduction <add>, %27, %cst_15 [1] : vector<16x128xf32> to vector<16xf32>
      %29 = vector.shape_cast %28 : vector<16xf32> to vector<16x1xf32>
      %30 = arith.addf %24, %29 : vector<16x1xf32>
      %c0_16 = arith.constant 0 : index
      %c0_17 = arith.constant 0 : index
      %31 = vector.load %arg8[%c0_16, %c0_17] : memref<16x1xf32, #tpu.memory_space<vmem>>, vector<16x1xf32>
      tpu.vector_store %arg8[%c0_16, %c0_17], %30 {strides = array<i32>} : memref<16x1xf32, #tpu.memory_space<vmem>>, vector<16x1xf32>,
      %c0_18 = arith.constant 0 : index
      %c0_19 = arith.constant 0 : index
      %32 = vector.load %arg7[%c0_18, %c0_19] : memref<16x1xf32, #tpu.memory_space<vmem>>, vector<16x1xf32>
      tpu.vector_store %arg7[%c0_18, %c0_19], %20 {strides = array<i32>} : memref<16x1xf32, #tpu.memory_space<vmem>>, vector<16x1xf32>,
    } else {
    }
    %c1_i32 = arith.constant 1 : i32
    %14 = arith.cmpi eq, %arg1, %c1_i32 : i32
    %15 = arith.extui %14 : i1 to i32
    %c0_i32_9 = arith.constant 0 : i32
    %16 = arith.cmpi ne, %15, %c0_i32_9 : i32
    scf.if %16 {
      %c0_10 = arith.constant 0 : index
      %c0_11 = arith.constant 0 : index
      %17 = vector.load %arg7[%c0_10, %c0_11] : memref<16x1xf32, #tpu.memory_space<vmem>>, vector<16x1xf32>
      %18 = vector.broadcast %17 : vector<16x1xf32> to vector<16x128xf32>
      %19 = arith.subf %5, %18 : vector<16x128xf32>
      %c0_12 = arith.constant 0 : index
      %c0_13 = arith.constant 0 : index
      %20 = vector.load %arg8[%c0_12, %c0_13] : memref<16x1xf32, #tpu.memory_space<vmem>>, vector<16x1xf32>
      %21 = math.log %20 : vector<16x1xf32>
      %22 = vector.broadcast %21 : vector<16x1xf32> to vector<16x128xf32>
      %23 = arith.subf %19, %22 : vector<16x128xf32>
      %c0_14 = arith.constant 0 : index
      %c0_15 = arith.constant 0 : index
      %24 = vector.load %arg6[%c0_14, %c0_15] : memref<16x128xf32, #tpu.memory_space<vmem>>, vector<16x128xf32>
      tpu.vector_store %arg6[%c0_14, %c0_15], %23 {strides = array<i32>} : memref<16x128xf32, #tpu.memory_space<vmem>>, vector<16x128xf32>,
    } else {
    }
    return
  }
  func.func @transform_0(%arg0: i32, %arg1: i32, %arg2: i32) -> (i32, i32) {
    %c0_i32 = arith.constant 0 : i32
    %c0_i32_0 = arith.constant 0 : i32
    return %arg0, %c0_i32 : i32, i32
  }
  func.func @transform_1(%arg0: i32, %arg1: i32, %arg2: i32) -> (i32, i32) {
    %c0_i32 = arith.constant 0 : i32
    %c0_i32_0 = arith.constant 0 : i32
    return %c0_i32, %arg2 : i32, i32
  }
  func.func @transform_2(%arg0: i32, %arg1: i32, %arg2: i32) -> (i32, i32) {
    %c0_i32 = arith.constant 0 : i32
    %c0_i32_0 = arith.constant 0 : i32
    return %c0_i32, %arg2 : i32, i32
  }
  func.func @transform_3(%arg0: i32, %arg1: i32, %arg2: i32) -> (i32, i32) {
    %0 = arith.muli %arg2, %arg1 : i32
    %c0_i32 = arith.constant 0 : i32
    return %arg0, %0 : i32, i32
  }
}

</mosaic_0001>

<llo_original>
// kernel: _generator_forward_2d.1
$region0: #{_generator_forward_2d.1}
  #allocation0 [shape = 'u32[]', space=smem, size = 0x4, offset = 0x4, fixed_abs, tag = 'smem constant byte address 0x4 - core index']
  #allocation1 [shape = 'u32[144,128]{1,0:T(1,128)}', space=vmem, size = 0x12000, scoped, tag = 'internal scratch']
  #allocation2 [shape = 'f32[16,1]{1,0:T(8,128)}', space=vmem, size = 0x2000, scoped, tag = 'scratch operand']
  #allocation3 [shape = 'f32[16,1]{1,0:T(8,128)}', space=vmem, size = 0x2000, scoped, tag = 'scratch operand']
  %s0 = inlined_call_operand.vmem [shape: bf16[16,32], index: 0, kind: input, shape index: {}]
  %s1 = inlined_call_operand.vmem [shape: bf16[32,128], index: 1, kind: input, shape index: {}]
  %s2 = inlined_call_operand.vmem [shape: f32[1,128], index: 2, kind: input, shape index: {}]
  %s3 = inlined_call_operand.hbm [shape: f32[16,128], index: 3, kind: output, shape index: {}]
  %s4 = sld [smem:[#allocation0]]
  $region57: #{_generator_forward_2d.1} parent=0
    _
  %s6 = ssub.s32 1, %s4
  %s7 = scalar_select 0, %s6, %s4
  $region1: #{_generator_forward_2d.1} parent=0
    #allocation4 [shape = 'u8[16384]{0}', space=vmem, size = 0x4000, scoped, tag = 'output window, operand 0']
    #allocation5 [shape = 's32[2]{0}', space=sflag, size = 0x8, scoped, tag = 'scoped memory for _generator_forward_2d.1']
    %8 = vsyncpa [#allocation5], 0
    %s9 = scalar_lea.sflag [#allocation5], 1
    %10 = vsyncpa %s9, 0
    loop: start=0, step=1, limit=4
    $region2: #{_generator_forward_2d.1} parent=1 // loop_pre_header
      _
    $region3: #{_generator_forward_2d.1} parent=1 // loop_header
      %s12 = sphi 0, %s16
      %p13 = scmp.ge.s32.totalorder %s12, 4
      %s19 = sphi 0, %s38
      %s20 = sphi 0, %s34
      %s21 = sphi 0, %s30
      %s22 = sphi 0, %s19
      %s23 = sphi 0, %s20
      %s24 = sphi 0, %s21
      %s25 = sphi 0, %s22
      %s26 = sphi 0, %s23
      %s27 = sphi 0, %s24
      %s41 = sphi 0, %s43
      %s44 = sphi 0, %s41
      %s45 = sphi 0, %s44
      %s61 = sphi 0, %s45
      %s67 = sphi 0, %s69
      %s70 = sphi 0, %s67
      %s71 = sphi 0, %s70
      %s87 = sphi 0, %s71
      %s93 = sphi 0, %s95
      %s96 = sphi 0, %s93
      %s97 = sphi 0, %s96
      %s113 = sphi 0, %s97
      %s123 = sphi 0, %s125
      %s126 = sphi 0, %s123
      %s127 = sphi 0, %s126
      %s143 = sphi 0, %s127
    $region4: #{_generator_forward_2d.1} parent=1 // loop_header_branch
      %15 = sbr.rel (%p13) target = $region8
    $region5: #{_generator_forward_2d.1} parent=1 // loop_body
      %s17 = ssub.s32 %s12, 1
      %s18 = ssub.s32 %s12, 2
      %s28 = sadd.s32 1, %s21
      %p29 = scmp.ge.s32.totalorder %s28, 1
      %s30 = scalar_select %p29, 0, %s28
      %s31 = sadd.s32 1, %s20
      %s32 = scalar_select %p29, %s31, %s20
      %p33 = scmp.ge.s32.totalorder %s32, 2
      %s34 = scalar_select %p33, 0, %s32
      %s35 = sadd.s32 1, %s19
      %s36 = scalar_select %p33, %s35, %s19
      %p37 = scmp.ge.s32.totalorder %s36, 1
      %s38 = scalar_select %p37, 0, %s36
      %s39 = ssub.s32 %s19, %s38
      %p40 = scmp.eq.s32.totalorder %s39, 0
      %s42 = sadd.s32 %s41, 1
      %s43 = scalar_select %p40, %s41, %s42
      %p46 = pneg %p40
      %p47 = scmp.eq.s32.totalorder %s12, 1
      %p48 = por %p46, %p47
      %p49 = scmp.ne.s32.totalorder %s41, %s44
      %p50 = scmp.eq.s32.totalorder %s12, 0
      %p51 = por %p49, %p50
      %p52 = scmp.ne.s32.totalorder %s41, %s44
      %p53 = scmp.eq.s32.totalorder %s17, 1
      %p54 = por %p52, %p53
      %p55 = scmp.ne.s32.totalorder %s44, %s45
      %p56 = scmp.eq.s32.totalorder %s17, 0
      %p57 = por %p55, %p56
      %p58 = scmp.ne.s32.totalorder %s44, %s45
      %p59 = scmp.eq.s32.totalorder %s18, 1
      %p60 = por %p58, %p59
      %p62 = scmp.ne.s32.totalorder %s45, %s61
      %p63 = scmp.eq.s32.totalorder %s18, 0
      %p64 = por %p62, %p63
      %s65 = ssub.s32 %s21, %s30
      %p66 = scmp.eq.s32.totalorder %s65, 0
      %s68 = sadd.s32 %s67, 1
      %s69 = scalar_select %p66, %s67, %s68
      %p72 = pneg %p66
      %p73 = scmp.eq.s32.totalorder %s12, 1
      %p74 = por %p72, %p73
      %p75 = scmp.ne.s32.totalorder %s67, %s70
      %p76 = scmp.eq.s32.totalorder %s12, 0
      %p77 = por %p75, %p76
      %p78 = scmp.ne.s32.totalorder %s67, %s70
      %p79 = scmp.eq.s32.totalorder %s17, 1
      %p80 = por %p78, %p79
      %p81 = scmp.ne.s32.totalorder %s70, %s71
      %p82 = scmp.eq.s32.totalorder %s17, 0
      %p83 = por %p81, %p82
      %p84 = scmp.ne.s32.totalorder %s70, %s71
      %p85 = scmp.eq.s32.totalorder %s18, 1
      %p86 = por %p84, %p85
      %p88 = scmp.ne.s32.totalorder %s71, %s87
      %p89 = scmp.eq.s32.totalorder %s18, 0
      %p90 = por %p88, %p89
      %s91 = ssub.s32 %s21, %s30
      %p92 = scmp.eq.s32.totalorder %s91, 0
      %s94 = sadd.s32 %s93, 1
      %s95 = scalar_select %p92, %s93, %s94
      %p98 = pneg %p92
      %p99 = scmp.eq.s32.totalorder %s12, 1
      %p100 = por %p98, %p99
      %p101 = scmp.ne.s32.totalorder %s93, %s96
      %p102 = scmp.eq.s32.totalorder %s12, 0
      %p103 = por %p101, %p102
      %p104 = scmp.ne.s32.totalorder %s93, %s96
      %p105 = scmp.eq.s32.totalorder %s17, 1
      %p106 = por %p104, %p105
      %p107 = scmp.ne.s32.totalorder %s96, %s97
      %p108 = scmp.eq.s32.totalorder %s17, 0
      %p109 = por %p107, %p108
      %p110 = scmp.ne.s32.totalorder %s96, %s97
      %p111 = scmp.eq.s32.totalorder %s18, 1
      %p112 = por %p110, %p111
      %p114 = scmp.ne.s32.totalorder %s97, %s113
      %p115 = scmp.eq.s32.totalorder %s18, 0
      %p116 = por %p114, %p115
      %s117 = smul.u32 %s21, %s20
      %s118 = smul.u32 %s30, %s34
      %s119 = ssub.s32 %s19, %s38
      %s120 = ssub.s32 %s117, %s118
      %s121 = sor.u32 %s119, %s120
      %p122 = scmp.eq.s32.totalorder %s121, 0
      %s124 = sadd.s32 %s123, 1
      %s125 = scalar_select %p122, %s123, %s124
      %p128 = pneg %p122
      %p129 = scmp.eq.s32.totalorder %s12, 1
      %p130 = por %p128, %p129
      %p131 = scmp.ne.s32.totalorder %s123, %s126
      %p132 = scmp.eq.s32.totalorder %s12, 0
      %p133 = por %p131, %p132
      %p134 = scmp.ne.s32.totalorder %s123, %s126
      %p135 = scmp.eq.s32.totalorder %s17, 1
      %p136 = por %p134, %p135
      %p137 = scmp.ne.s32.totalorder %s126, %s127
      %p138 = scmp.eq.s32.totalorder %s17, 0
      %p139 = por %p137, %p138
      %p140 = scmp.ne.s32.totalorder %s126, %s127
      %p141 = scmp.eq.s32.totalorder %s18, 1
      %p142 = por %p140, %p141
      %p144 = scmp.ne.s32.totalorder %s127, %s143
      %p145 = scmp.eq.s32.totalorder %s18, 0
      %p146 = por %p144, %p145
      %p147 = scmp.le.s32.totalorder 1, %s12
      %p148 = scmp.lt.s32.totalorder %s12, 3
      %p149 = pnand %p147, %p148
      %p150 = pneg %p149
      // Predicated region
      $region9: #{_generator_forward_2d.1} parent=5 // pred_check
        _
      $region10: #{_generator_forward_2d.1} parent=5 // pred_check_branch
        %152 = sbr.rel (%p149) target = $region12
      $region11: #{_generator_forward_2d.1} parent=5 // pred_region
        %s153 = ssub.s32 %s12, 1
        // Predicated region
        $region13: #{_generator_forward_2d.1} parent=11 // pred_check
          %p154 = pneg %p57
        $region14: #{_generator_forward_2d.1} parent=11 // pred_check_branch
          %156 = sbr.rel (%p154) target = $region16
        $region15: #{_generator_forward_2d.1} parent=11 // pred_region
          %s157 = smul.u32 2, %s22
          %p158 = scmp.lt.s32.totalorder %s157, 1
          %s159 = scalar_select %p158, %s157, 1
          %s160 = smul.addr %s159, 4
          %s161 = scalar_lea.vmem %s0, %s160
          %s162 = smul.u32 2, %s22
        $region16: #{_generator_forward_2d.1} parent=11 // pred_fallthru
          _
        // Predicated region
        $region17: #{_generator_forward_2d.1} parent=11 // pred_check
          %p163 = pneg %p83
        $region18: #{_generator_forward_2d.1} parent=11 // pred_check_branch
          %165 = sbr.rel (%p163) target = $region20
        $region19: #{_generator_forward_2d.1} parent=11 // pred_region
          %p166 = scmp.lt.s32.totalorder %s24, 0
          %s167 = scalar_select %p166, %s24, 0
          %s168 = smul.addr %s167, 4
          %s169 = scalar_lea.vmem %s1, %s168
        $region20: #{_generator_forward_2d.1} parent=11 // pred_fallthru
          _
        // Predicated region
        $region21: #{_generator_forward_2d.1} parent=11 // pred_check
          %p170 = pneg %p109
        $region22: #{_generator_forward_2d.1} parent=11 // pred_check_branch
          %172 = sbr.rel (%p170) target = $region24
        $region23: #{_generator_forward_2d.1} parent=11 // pred_region
          %p173 = scmp.lt.s32.totalorder %s24, 0
          %s174 = scalar_select %p173, %s24, 0
          %s175 = scalar_lea.vmem %s2, %s174
        $region24: #{_generator_forward_2d.1} parent=11 // pred_fallthru
          _
      $region12: #{_generator_forward_2d.1} parent=5 // pred_fallthru
        _
      %p176 = scmp.lt.s32.totalorder %s12, 2
      // Predicated region
      $region25: #{_generator_forward_2d.1} parent=5 // pred_check
        %p177 = pneg %p176
      $region26: #{_generator_forward_2d.1} parent=5 // pred_check_branch
        %179 = sbr.rel (%p177) target = $region28
      $region27: #{_generator_forward_2d.1} parent=5 // pred_region
        _
      $region28: #{_generator_forward_2d.1} parent=5 // pred_fallthru
        _
      %p180 = scmp.le.s32.totalorder 1, %s12
      %p181 = scmp.lt.s32.totalorder %s12, 3
      %p182 = pnand %p180, %p181
      %p183 = pneg %p182
      // Predicated region
      $region29: #{_generator_forward_2d.1} parent=5 // pred_check
        _
      $region30: #{_generator_forward_2d.1} parent=5 // pred_check_branch
        %185 = sbr.rel (%p182) target = $region32
      $region31: #{_generator_forward_2d.1} parent=5 // pred_region
        %s186 = ssub.s32 %s12, 1
        %s187 = smul.u32 2, %s22
        %p188 = scmp.lt.s32.totalorder %s187, 1
        %s189 = scalar_select %p188, %s187, 1
        %s190 = smul.addr %s189, 4
        %s191 = scalar_lea.vmem %s0, %s190
        %p192 = pneg %p57
        %p193 = pneg %p54
        %p194 = scmp.lt.s32.totalorder %s24, 0
        %s195 = scalar_select %p194, %s24, 0
        %s196 = smul.addr %s195, 4
        %s197 = scalar_lea.vmem %s1, %s196
        %p198 = pneg %p83
        %p199 = pneg %p80
        %p200 = scmp.lt.s32.totalorder %s24, 0
        %s201 = scalar_select %p200, %s24, 0
        %s202 = scalar_lea.vmem %s2, %s201
        %p203 = pneg %p109
        %p204 = pneg %p106
        %p205 = pneg %p139
        %p206 = pneg %p136
        %s207 = sand.u32 %s126, 1
        %s208 = scalar_lea.sflag [#allocation5], %s207
        %s209 = sand.u32 %s126, 1
        %s210 = smul.addr %s209, 16
        %s211 = scalar_lea.vmem [#allocation4], %s210
        %s212 = smul.u32 2, %s22
        %p213 = scmp.lt.s32.totalorder %s212, 1
        %s214 = scalar_select %p213, %s212, 1
        %s215 = smul.addr %s214, 4
        %s216 = scalar_lea.vmem %s0, %s215
        %s217 = smul.u32 2, %s22
        %p218 = scmp.lt.s32.totalorder %s24, 0
        %s219 = scalar_select %p218, %s24, 0
        %s220 = smul.addr %s219, 4
        %s221 = scalar_lea.vmem %s1, %s220
        %p222 = scmp.lt.s32.totalorder %s24, 0
        %s223 = scalar_select %p222, %s24, 0
        %s224 = scalar_lea.vmem %s2, %s223
        %s225 = smul.u32 %s24, %s23
        %s226 = smul.u32 2, %s22
        %v228 = vld [vmem:[%s216] sm:$0xf]
        %v229 = vld [vmem:[%s216 + $0x4] sm:$0xf]
        %v230 = vld [vmem:[%s221] sm:$0xf]
        %v231 = vld [vmem:[%s221 + $0x4] sm:$0xf]
        %v232 = vld [vmem:[%s221 + $0x8] sm:$0xf]
        %v233 = vld [vmem:[%s221 + $0xc] sm:$0xf]
        %v234 = vld [vmem:[%s224] sm:$0x1]
        %v236 = vlaneseq
        %v237 = vshrl.u32 %v236, 7
        %v238 = vsub.s32 0, %v237
        %v239 = vrot.slane %v234, %v238
        %v243 = vunpack.c.l.b16 %v228
        %v244 = vunpack.c.l.b16 %v229
        %v245 = vpack.c.b16 %v244, %v243
        %v250 = vunpack.c.l.b16 %v230
        %v251 = vunpack.c.l.b16 %v231
        %v252 = vunpack.c.l.b16 %v232
        %v253 = vunpack.c.l.b16 %v233
        %v254 = vpack.c.b16 %v251, %v250
        %v255 = vpack.c.b16 %v253, %v252
        %vm258 = vcmask 261120
        %v260 = vsel %vm258, %v245, 0
        %262 = vmatprep.subr.bf16.mxu0 0
        %263 = vmatpush1.bf16.msra.mxu0 0
        %264 = vmatprep.subr.bf16.mxu0 0
        %265 = vmatpush1.bf16.msra.mxu0 0
        %266 = vmatprep.subr.bf16.mxu0 0
        %267 = vmatpush1.bf16.msra.mxu0 0
        %268 = vmatprep.subr.bf16.mxu0 0
        %269 = vmatpush1.bf16.msra.mxu0 0
        %270 = vmatprep.subr.bf16.mxu0 0
        %271 = vmatpush1.bf16.msra.mxu0 0
        %272 = vmatprep.subr.bf16.mxu0 0
        %273 = vmatpush1.bf16.msra.mxu0 0
        %274 = vmatprep.subr.bf16.mxu0 0
        %275 = vmatpush1.bf16.msra.mxu0 %v255
        %276 = vmatprep.subr.bf16.mxu0 0
        %277 = vmatpush1.bf16.msra.mxu0 %v254
        %278 = vmatprep.subr.bf16.mxu0 0
        %279 = vmatpush2.bf16.msra.mxu0 0
        %280 = vmatprep.subr.bf16.mxu0 0
        %281 = vmatpush2.bf16.msra.mxu0 0
        %282 = vmatprep.subr.bf16.mxu0 0
        %283 = vmatpush2.bf16.msra.mxu0 0
        %284 = vmatprep.subr.bf16.mxu0 0
        %285 = vmatpush2.bf16.msra.mxu0 0
        %286 = vmatprep.subr.bf16.mxu0 0
        %287 = vmatpush2.bf16.msra.mxu0 0
        %288 = vmatprep.subr.bf16.mxu0 0
        %289 = vmatpush2.bf16.msra.mxu0 0
        %290 = vmatprep.subr.bf16.mxu0 0
        %291 = vmatpush2.bf16.msra.mxu0 0
        %292 = vmatprep.subr.bf16.mxu0 0
        %293 = vmatpush2.bf16.msra.mxu0 0
        %294 = vmatprep.mubr.bf16.mxu0 0
        %295 = vmatmul.mubr.bf16.gmra.mxu0 %v260
        %v296 = vpop.f32.mrf.mxu0
        %v297 = vadd.f32 %v239, %v296
        %v298 = vpop.f32.mrf.mxu0
        %v299 = vpop.f32.mrf.mxu0
        %v300 = vadd.f32 %v239, %v299
        %v301 = vpop.f32.mrf.mxu0
        %302 = vdwg.mxu0
        %p303 = scmp.eq.s32.totalorder %s23, 0
        %p304 = scmp.eq.s32.totalorder %s24, 0
        %p305 = pnand %p303, %p304
        %p306 = pneg %p305
        // Predicated region
        $region33: #{_generator_forward_2d.1} parent=31 // pred_check
          _
        $region34: #{_generator_forward_2d.1} parent=31 // pred_check_branch
          %308 = sbr.rel (%p305) target = $region36
        $region35: #{_generator_forward_2d.1} parent=31 // pred_region
          %vm309 = vcmask 7168
          %310 = vst.msk [vmem:[#allocation2] sm:$0xff] %vm309, -inf
          %311 = vst.msk [vmem:[#allocation2 + $0x8] sm:$0xff] %vm309, -inf
          %312 = vst.msk [vmem:[#allocation3] sm:$0xff] %vm309, 0.0
          %313 = vst.msk [vmem:[#allocation3 + $0x8] sm:$0xff] %vm309, 0.0
        $region36: #{_generator_forward_2d.1} parent=31 // pred_fallthru
          _
        // Predicated region
        $region37: #{_generator_forward_2d.1} parent=31 // pred_check
          %p314 = pneg %p303
        $region38: #{_generator_forward_2d.1} parent=31 // pred_check_branch
          %316 = sbr.rel (%p314) target = $region40
        $region39: #{_generator_forward_2d.1} parent=31 // pred_region
          %v317 = vld [vmem:[#allocation2] sm:$0xff]
          %v318 = vld [vmem:[#allocation2 + $0x8] sm:$0xff]
          %319 = vmax.xlane.f32.xlu0 %v297
          %v320 = vpop.xlane.xlu0 %319
          %321 = vmax.xlane.f32.xlu0 %v300
          %v322 = vpop.xlane.xlu0 %321
          %v323 = vmax.f32 %v317, %v320
          %v324 = vmax.f32 %v318, %v322
          %v325 = vsub.f32 %v317, %v323
          %v326 = vsub.f32 %v318, %v324
          %v327 = vmul.f32 %v325, 1.442695
          %v328 = vpow.pop %v327
          %v329 = vmul.f32 %v326, 1.442695
          %v330 = vpow.pop %v329
          %v331 = vld [vmem:[#allocation3] sm:$0xff]
          %v332 = vld [vmem:[#allocation3 + $0x8] sm:$0xff]
          %v333 = vmul.f32 %v328, %v331
          %v334 = vmul.f32 %v330, %v332
          %336 = vset.pattern.permute.xlu0 0
          %337 = vperm.xlu0 %336, %v323
          %v338 = vpop.permute.xlu0 %337
          %341 = vset.pattern.permute.xlu0 0
          %342 = vperm.xlu0 %341, %v324
          %v343 = vpop.permute.xlu0 %342
          %v345 = vsub.f32 %v297, %v338
          %v346 = vsub.f32 %v300, %v343
          %v347 = vmul.f32 %v345, 1.442695
          %v348 = vpow.pop %v347
          %v349 = vmul.f32 %v346, 1.442695
          %v350 = vpow.pop %v349
          %351 = vadd.xlane.f32.xlu0 %v348
          %v352 = vpop.xlane.xlu0 %351
          %353 = vadd.xlane.f32.xlu0 %v350
          %v354 = vpop.xlane.xlu0 %353
          %v355 = vadd.f32 %v333, %v352
          %v356 = vadd.f32 %v334, %v354
          %vm357 = vcmask 7168
          %358 = vst.msk [vmem:[#allocation3] sm:$0xff] %vm357, %v355
          %359 = vst.msk [vmem:[#allocation3 + $0x8] sm:$0xff] %vm357, %v356
          %360 = vst.msk [vmem:[#allocation2] sm:$0xff] %vm357, %v323
          %361 = vst.msk [vmem:[#allocation2 + $0x8] sm:$0xff] %vm357, %v324
        $region40: #{_generator_forward_2d.1} parent=31 // pred_fallthru
          _
        %p362 = scmp.eq.s32.totalorder %s23, 1
        // Predicated region
        $region41: #{_generator_forward_2d.1} parent=31 // pred_check
          %p363 = pneg %p362
        $region42: #{_generator_forward_2d.1} parent=31 // pred_check_branch
          %365 = sbr.rel (%p363) target = $region44
        $region43: #{_generator_forward_2d.1} parent=31 // pred_region
          %v366 = vld [vmem:[#allocation2] sm:$0xff]
          %v367 = vld [vmem:[#allocation2 + $0x8] sm:$0xff]
          %369 = vset.pattern.permute.xlu0 0
          %370 = vperm.xlu0 %369, %v366
          %v371 = vpop.permute.xlu0 %370
          %374 = vset.pattern.permute.xlu0 0
          %375 = vperm.xlu0 %374, %v367
          %v376 = vpop.permute.xlu0 %375
          %v378 = vsub.f32 %v297, %v371
          %v379 = vsub.f32 %v300, %v376
          %v380 = vld [vmem:[#allocation3] sm:$0xff]
          %v381 = vld [vmem:[#allocation3 + $0x8] sm:$0xff]
          %v382 = vlog2.pop %v380
          %v383 = vmul.f32 %v382, 0.6931472
          %v384 = vlog2.pop %v381
          %v385 = vmul.f32 %v384, 0.6931472
          %387 = vset.pattern.permute.xlu0 0
          %388 = vperm.xlu0 %387, %v383
          %v389 = vpop.permute.xlu0 %388
          %392 = vset.pattern.permute.xlu0 0
          %393 = vperm.xlu0 %392, %v385
          %v394 = vpop.permute.xlu0 %393
          %v396 = vsub.f32 %v378, %v389
          %v397 = vsub.f32 %v379, %v394
          %398 = vst [vmem:[%s211] sm:$0xff] %v396
          %399 = vst [vmem:[%s211 + $0x8] sm:$0xff] %v397
        $region44: #{_generator_forward_2d.1} parent=31 // pred_fallthru
          _
        %s400 = sand.u32 %s126, 1
        %s401 = scalar_lea.sflag [#allocation5], %s400
        %s402 = sand.u32 %s126, 1
        %s403 = smul.addr %s402, 16
        %s404 = scalar_lea.vmem [#allocation4], %s403
        // Predicated region
        $region45: #{_generator_forward_2d.1} parent=31 // pred_check
          %p405 = pneg %p136
        $region46: #{_generator_forward_2d.1} parent=31 // pred_check_branch
          %407 = sbr.rel (%p405) target = $region48
        $region47: #{_generator_forward_2d.1} parent=31 // pred_region
          %s408 = smul.u32 %s24, %s23
          %s409 = smul.u32 2, %s22
          %s411 = ssub.s32 256, 256
          %412 = vsyncadd %s401, %s411
          %s413 = sadd.s32 %s408, %s409
          %s414 = smul.addr %s413, 128
          %s415 = scalar_lea.hbm %s3, %s414
          %s416 = sshll.u32 %s404, 4
          %s417 = int_to_ptr.vmem [resolvable:$true] %s416
          %422 = dma.vmem_to_hbm [thread:$0]  %s417, 256, %s415, %s401, 128, 128, 8
        $region48: #{_generator_forward_2d.1} parent=31 // pred_fallthru
          _
      $region32: #{_generator_forward_2d.1} parent=5 // pred_fallthru
        _
      %p423 = scmp.le.s32.totalorder 2, %s12
      // Predicated region
      $region49: #{_generator_forward_2d.1} parent=5 // pred_check
        %p424 = pneg %p423
      $region50: #{_generator_forward_2d.1} parent=5 // pred_check_branch
        %426 = sbr.rel (%p424) target = $region52
      $region51: #{_generator_forward_2d.1} parent=5 // pred_region
        %s427 = ssub.s32 %s12, 2
        // Predicated region
        $region53: #{_generator_forward_2d.1} parent=51 // pred_check
          %p428 = pneg %p142
        $region54: #{_generator_forward_2d.1} parent=51 // pred_check_branch
          %430 = sbr.rel (%p428) target = $region56
        $region55: #{_generator_forward_2d.1} parent=51 // pred_region
          %s431 = sand.u32 %s127, 1
          %s432 = scalar_lea.sflag [#allocation5], %s431
          %s433 = sand.u32 %s127, 1
          %s434 = smul.addr %s433, 16
          %s435 = scalar_lea.vmem [#allocation4], %s434
          %436 = dma.done %s432, 256
        $region56: #{_generator_forward_2d.1} parent=51 // pred_fallthru
          _
      $region52: #{_generator_forward_2d.1} parent=5 // pred_fallthru
        _
    $region6: #{_generator_forward_2d.1} parent=1 // loop_footer
      %s16 = sadd.s32 1, %s12
    $region7: #{_generator_forward_2d.1} parent=1 // loop_footer_branch
      %11 = sbr.rel target = $region3
    $region8: #{_generator_forward_2d.1} parent=1 // loop_exit
      _
    %437 = vsyncpa [#allocation5], 1
    %s438 = scalar_lea.sflag [#allocation5], 1
    %439 = vsyncpa %s438, 1

</llo_original>
